<compile_context>
chip_gen: v5e
topology: v5e:2x2
jax: 0.10.0
libtpu: 0.0.40
codegen_flags: <defaults>
</compile_context>

<pallas_src>
import functools

import jax
import jax.numpy as jnp
from jax.experimental import pallas as pl
from jax.experimental.pallas import tpu as pltpu


# ------------------------------- config ------------------------------------ #
class Config:
    input_dim = 32
    hidden_dim = 64
    output_dim = 16
    enable_bias = True
    drop_prob = 0.1          # dropout is identity in eval / inference mode
    mlp_activation = "gelu"  # exact (erf-based) GELU, matching F.gelu default
    loss_type = "labels_mse"


_INV_SQRT2 = 0.7071067811865475  # hoisted GELU constant


def _round_up(n, m):
    return ((n + m - 1) // m) * m


# ------------------------------- kernel ------------------------------------ #
def _mlp_kernel(x_ref, w1_ref, b1_ref, w2_ref, b2_ref, o_ref, *, approximate):
    """Fused MLP tile: y = gelu(x @ W1 + b1) @ W2 + b2 for one (TM, .) row tile."""
    x = x_ref[...]

    # fc1 (MXU, f32 accumulation)
    h = jnp.dot(x, w1_ref[...], preferred_element_type=jnp.float32) + b1_ref[...]

    if approximate:
        # tanh-approx GELU (== F.gelu(approximate='tanh')): transcendental goes to the EUP slot.
        h = jax.nn.gelu(h, approximate=True)
    else:
        # exact GELU: 0.5 * x * (1 + erf(x / sqrt(2)))  (PyTorch F.gelu default).
        # f32 erf is a VALU polynomial -> VALU is the saturating slot; kept for exact parity.
        h = 0.5 * h * (1.0 + jax.lax.erf(h * _INV_SQRT2))

    # fc2 (MXU, f32 accumulation) + bias; dropout is identity in eval mode.
    y = jnp.dot(h, w2_ref[...], preferred_element_type=jnp.float32) + b2_ref[...]
    o_ref[...] = y.astype(o_ref.dtype)


def _choose_tm(batch, tm_max):
    """Row-tile size: big enough to amortize step overhead, split so v7x's 2 TCs both work."""
    tm = min(tm_max, _round_up(batch, 8))
    # v7x megacore: ensure >= 2 grid steps when the batch allows, so the "parallel"
    # batch axis can actually be sharded across both TensorCores.
    if pl.cdiv(batch, tm) < 2 and batch > 8:
        tm = min(tm, _round_up(pl.cdiv(batch, 2), 8))
    return tm


def mlp_forward(x, w1p, b1p, w2p, b2p, *, tm_max=1024, approximate=False):
    """Run the fused MLP Pallas kernel on pre-padded (lane-dense hidden) parameters.

    Args:
      x:   (B, input_dim) float32
      w1p: (input_dim, hid_p)  -- torch fc1.weight.T, hidden padded to a multiple of 128
      b1p: (1, hid_p)
      w2p: (hid_p, output_dim) -- torch fc2.weight.T, rows padded to match hid_p
      b2p: (1, output_dim)
    Returns:
      y_pred: (B, output_dim) float32
    """
    B, in_dim = x.shape
    hid_p = w1p.shape[1]
    out_dim = w2p.shape[1]

    tm = _choose_tm(B, tm_max)
    grid = (pl.cdiv(B, tm),)  # last block is clipped; OOB writes are dropped by Pallas

    kernel = functools.partial(_mlp_kernel, approximate=approximate)

    return pl.pallas_call(
        kernel,
        out_shape=jax.ShapeDtypeStruct((B, out_dim), x.dtype),
        grid=grid,
        in_specs=[
            pl.BlockSpec((tm, in_dim), lambda i: (i, 0)),     # x row tile (pipelined)
            pl.BlockSpec((in_dim, hid_p), lambda i: (0, 0)),  # W1 (resident; constant block idx)
            pl.BlockSpec((1, hid_p), lambda i: (0, 0)),       # b1
            pl.BlockSpec((hid_p, out_dim), lambda i: (0, 0)),  # W2
            pl.BlockSpec((1, out_dim), lambda i: (0, 0)),      # b2
        ],
        out_specs=pl.BlockSpec((tm, out_dim), lambda i: (i, 0)),  # compact, unsliced output
        compiler_params=pltpu.CompilerParams(
            dimension_semantics=("parallel",),
            # VMEM footprint at TM=1024 is ~1 MiB double-buffered: defaults are ample on
            # v5e/v6e/v7x. Set vmem_limit_bytes explicitly only if tiles / dtypes grow.
        ),
    )(x, w1p, b1p, w2p, b2p)


def mlp_apply(params, x, y_targets=None):
    """Mirror of MLP.forward: returns y_pred, or (y_pred, loss) if y_targets given."""
    y_pred = mlp_forward(x, params["w1"], params["b1"], params["w2"], params["b2"])
    if y_targets is None:
        return y_pred
    # labels_mse loss (mean reduction) — cheap glue reduction in plain JAX.
    loss = jnp.mean((y_pred - y_targets) ** 2)
    return y_pred, loss


# --------------------------- parameters -------------------------------------- #
def init_params(key, cfg):
    """Deterministic init matching nn.Linear shapes (stored transposed)."""
    k1, k2, k3, k4 = jax.random.split(key, 4)
    lim1 = 1.0 / jnp.sqrt(cfg.input_dim)
    lim2 = 1.0 / jnp.sqrt(cfg.hidden_dim)
    w1 = jax.random.uniform(k1, (cfg.input_dim, cfg.hidden_dim),
                            minval=-lim1, maxval=lim1, dtype=jnp.float32)
    b1 = jax.random.uniform(k2, (1, cfg.hidden_dim),
                            minval=-lim1, maxval=lim1, dtype=jnp.float32)
    w2 = jax.random.uniform(k3, (cfg.hidden_dim, cfg.output_dim),
                            minval=-lim2, maxval=lim2, dtype=jnp.float32)
    b2 = jax.random.uniform(k4, (1, cfg.output_dim),
                            minval=-lim2, maxval=lim2, dtype=jnp.float32)
    if not cfg.enable_bias:
        b1 = jnp.zeros_like(b1)
        b2 = jnp.zeros_like(b2)
    return {"w1": w1, "b1": b1, "w2": w2, "b2": b2}


def prepare_params(params):
    """Pad ONCE (not per call): hidden dim -> multiple of 128 lanes.

    gelu(0 + 0) = 0 and zero rows of W2 contribute nothing, so results are unchanged.
    input_dim and output_dim are intentionally left unpadded (dominant HBM streams).
    """
    w1, b1, w2, b2 = params["w1"], params["b1"], params["w2"], params["b2"]
    hid = w1.shape[1]
    hid_p = _round_up(hid, 128)
    return {
        "w1": jnp.pad(w1, ((0, 0), (0, hid_p - hid))),
        "b1": jnp.pad(b1, ((0, 0), (0, hid_p - hid))),
        "w2": jnp.pad(w2, ((0, hid_p - hid), (0, 0))),
        "b2": b2,
    }


# ------------------------------- main --------------------------------------- #
if __name__ == "__main__":
    cfg = Config()
    key = jax.random.PRNGKey(0)
    kp, kx, ky = jax.random.split(key, 3)

    params = init_params(kp, cfg)
    prepared = prepare_params(params)   # one-time padding, outside the per-call path

    # Batch deliberately NOT a multiple of the row tile: exercises the clipped last block
    # (no jnp.pad / no output slice anywhere in the forward path).
    batch = 20
    x = jax.random.normal(kx, (batch, cfg.input_dim), dtype=jnp.float32)
    y_targets = jax.random.normal(ky, (batch, cfg.output_dim), dtype=jnp.float32)

    fwd = jax.jit(lambda p, xx: mlp_apply(p, xx))
    fwd_with_loss = jax.jit(mlp_apply)

    # forward without targets
    y_pred = jax.block_until_ready(fwd(prepared, x))

    # forward with targets -> (y_pred, loss)
    y_pred2, loss = fwd_with_loss(prepared, x, y_targets)
    jax.block_until_ready((y_pred2, loss))

    # sanity check against a plain-JAX reference (unpadded params)
    h_ref = jax.nn.gelu(x @ params["w1"] + params["b1"], approximate=False)
    y_ref = h_ref @ params["w2"] + params["b2"]
    assert y_pred.shape == (batch, cfg.output_dim)
    assert jnp.allclose(y_pred, y_ref, atol=1e-5, rtol=1e-5)
    assert jnp.allclose(y_pred2, y_ref, atol=1e-5, rtol=1e-5)
    assert jnp.allclose(loss, jnp.mean((y_ref - y_targets) ** 2), atol=1e-5, rtol=1e-5)

    print("KERNEL_OK")
</pallas_src>

<mosaic_0001>
module attributes {stable_mosaic.version = 11 : i64} {
  func.func @_mlp_kernel(%arg0: i32, %arg1: memref<16x32xf32, #tpu.memory_space<vmem>>, %arg2: memref<32x128xf32, #tpu.memory_space<vmem>>, %arg3: memref<1x128xf32, #tpu.memory_space<vmem>>, %arg4: memref<128x16xf32, #tpu.memory_space<vmem>>, %arg5: memref<1x16xf32, #tpu.memory_space<vmem>>, %arg6: memref<16x16xf32, #tpu.memory_space<vmem>>) attributes {dimension_semantics = [#tpu.dimension_semantics<parallel>], iteration_bounds = array<i64: 2>, scalar_prefetch = 0 : i64, scratch_operands = 0 : i64, tpu.core_type = #tpu.core_type<tc>, window_params = [{transform_indices = @transform_0, window_bounds = array<i64: 16, 32>}, {pipeline_mode = #tpu.pipeline_mode<synchronous>, transform_indices = @transform_1, window_bounds = array<i64: 32, 128>}, {pipeline_mode = #tpu.pipeline_mode<synchronous>, transform_indices = @transform_2, window_bounds = array<i64: 1, 128>}, {pipeline_mode = #tpu.pipeline_mode<synchronous>, transform_indices = @transform_3, window_bounds = array<i64: 128, 16>}, {pipeline_mode = #tpu.pipeline_mode<synchronous>, transform_indices = @transform_4, window_bounds = array<i64: 1, 16>}, {transform_indices = @transform_5, window_bounds = array<i64: 16, 16>}]} {
    %c0 = arith.constant 0 : index
    %c0_0 = arith.constant 0 : index
    %0 = vector.load %arg1[%c0, %c0_0] : memref<16x32xf32, #tpu.memory_space<vmem>>, vector<16x32xf32>
    %c0_1 = arith.constant 0 : index
    %c0_2 = arith.constant 0 : index
    %1 = vector.load %arg2[%c0_1, %c0_2] : memref<32x128xf32, #tpu.memory_space<vmem>>, vector<32x128xf32>
    %cst = arith.constant dense<0.000000e+00> : vector<16x128xf32>
    %2 = tpu.matmul %0, %1, %cst {dimension_numbers = #tpu.dot_dimension_numbers<[1], [0], [0], [1], [0, 0, 1, 1], [], []>} : vector<16x32xf32>, vector<32x128xf32>, vector<16x128xf32> -> vector<16x128xf32>
    %c0_3 = arith.constant 0 : index
    %c0_4 = arith.constant 0 : index
    %3 = vector.load %arg3[%c0_3, %c0_4] : memref<1x128xf32, #tpu.memory_space<vmem>>, vector<1x128xf32>
    %4 = vector.broadcast %3 : vector<1x128xf32> to vector<16x128xf32>
    %5 = arith.addf %2, %4 : vector<16x128xf32>
    %cst_5 = arith.constant 5.000000e-01 : f32
    %6 = vector.broadcast %cst_5 : f32 to vector<16x128xf32>
    %7 = arith.mulf %6, %5 : vector<16x128xf32>
    %cst_6 = arith.constant 0.707106769 : f32
    %8 = vector.broadcast %cst_6 : f32 to vector<16x128xf32>
    %9 = arith.mulf %5, %8 : vector<16x128xf32>
    %10 = math.erf %9 : vector<16x128xf32>
    %cst_7 = arith.constant 1.000000e+00 : f32
    %11 = vector.broadcast %cst_7 : f32 to vector<16x128xf32>
    %12 = arith.addf %11, %10 : vector<16x128xf32>
    %13 = arith.mulf %7, %12 : vector<16x128xf32>
    %c0_8 = arith.constant 0 : index
    %c0_9 = arith.constant 0 : index
    %14 = vector.load %arg4[%c0_8, %c0_9] : memref<128x16xf32, #tpu.memory_space<vmem>>, vector<128x16xf32>
    %cst_10 = arith.constant dense<0.000000e+00> : vector<16x16xf32>
    %15 = tpu.matmul %13, %14, %cst_10 {dimension_numbers = #tpu.dot_dimension_numbers<[1], [0], [0], [1], [0, 0, 1, 1], [], []>} : vector<16x128xf32>, vector<128x16xf32>, vector<16x16xf32> -> vector<16x16xf32>
    %c0_11 = arith.constant 0 : index
    %c0_12 = arith.constant 0 : index
    %16 = vector.load %arg5[%c0_11, %c0_12] : memref<1x16xf32, #tpu.memory_space<vmem>>, vector<1x16xf32>
    %17 = vector.broadcast %16 : vector<1x16xf32> to vector<16x16xf32>
    %18 = arith.addf %15, %17 : vector<16x16xf32>
    %c0_13 = arith.constant 0 : index
    %c0_14 = arith.constant 0 : index
    %19 = vector.load %arg6[%c0_13, %c0_14] : memref<16x16xf32, #tpu.memory_space<vmem>>, vector<16x16xf32>
    tpu.vector_store %arg6[%c0_13, %c0_14], %18 {strides = array<i32>} : memref<16x16xf32, #tpu.memory_space<vmem>>, vector<16x16xf32>,
    return
  }
  func.func @transform_0(%arg0: i32) -> (i32, i32) {
    %c0_i32 = arith.constant 0 : i32
    %c0_i32_0 = arith.constant 0 : i32
    return %arg0, %c0_i32 : i32, i32
  }
  func.func @transform_1(%arg0: i32) -> (i32, i32) {
    %c0_i32 = arith.constant 0 : i32
    %c0_i32_0 = arith.constant 0 : i32
    %c0_i32_1 = arith.constant 0 : i32
    return %c0_i32, %c0_i32_0 : i32, i32
  }
  func.func @transform_2(%arg0: i32) -> (i32, i32) {
    %c0_i32 = arith.constant 0 : i32
    %c0_i32_0 = arith.constant 0 : i32
    %c0_i32_1 = arith.constant 0 : i32
    return %c0_i32, %c0_i32_0 : i32, i32
  }
  func.func @transform_3(%arg0: i32) -> (i32, i32) {
    %c0_i32 = arith.constant 0 : i32
    %c0_i32_0 = arith.constant 0 : i32
    %c0_i32_1 = arith.constant 0 : i32
    return %c0_i32, %c0_i32_0 : i32, i32
  }
  func.func @transform_4(%arg0: i32) -> (i32, i32) {
    %c0_i32 = arith.constant 0 : i32
    %c0_i32_0 = arith.constant 0 : i32
    %c0_i32_1 = arith.constant 0 : i32
    return %c0_i32, %c0_i32_0 : i32, i32
  }
  func.func @transform_5(%arg0: i32) -> (i32, i32) {
    %c0_i32 = arith.constant 0 : i32
    %c0_i32_0 = arith.constant 0 : i32
    return %arg0, %c0_i32 : i32, i32
  }
}

</mosaic_0001>

<llo_original>
// kernel: _lambda_.1
$region0: #{_lambda_.1}
  #allocation0 [shape = 'u32[]', space=smem, size = 0x4, offset = 0x4, fixed_abs, tag = 'smem constant byte address 0x4 - core index']
  #allocation1 [shape = 'u32[72,128]{1,0:T(1,128)}', space=vmem, size = 0x9000, scoped, tag = 'internal scratch']
  %s0 = inlined_call_operand.vmem [shape: f32[20,32], index: 0, kind: input, shape index: {}]
  %s1 = inlined_call_operand.vmem [shape: f32[32,128], index: 1, kind: input, shape index: {}]
  %s2 = inlined_call_operand.vmem [shape: f32[1,128], index: 2, kind: input, shape index: {}]
  %s3 = inlined_call_operand.vmem [shape: f32[128,16], index: 3, kind: input, shape index: {}]
  %s4 = inlined_call_operand.vmem [shape: f32[1,16], index: 4, kind: input, shape index: {}]
  %s5 = inlined_call_operand.vmem [shape: f32[20,16], index: 5, kind: output, shape index: {}]
  %s6 = sld [smem:[#allocation0]]
  $region101: #{_lambda_.1} parent=0
    _
  %s8 = ssub.s32 1, %s6
  %s9 = scalar_select 0, %s8, %s6
  $region1: #{_lambda_.1} parent=0
    #allocation2 [shape = 'u8[16384]{0}', space=vmem, size = 0x4000, scoped, tag = 'output window, operand 0']
    loop: start=0, step=1, limit=4
    $region2: #{_lambda_.1} parent=1 // loop_pre_header
      _
    $region3: #{_lambda_.1} parent=1 // loop_header
      %s11 = sphi 0, %s15
      %p12 = scmp.ge.s32.totalorder %s11, 4
      %s21 = sphi 0, %s23
      %s24 = sphi 0, %s21
      %s25 = sphi 0, %s24
      %s41 = sphi 0, %s25
      %s45 = sphi 0, %s45
      %s47 = sphi 0, %s45
      %s48 = sphi 0, %s47
      %s62 = sphi 0, %s48
      %s66 = sphi 0, %s66
      %s68 = sphi 0, %s66
      %s69 = sphi 0, %s68
      %s83 = sphi 0, %s69
      %s87 = sphi 0, %s87
      %s89 = sphi 0, %s87
      %s90 = sphi 0, %s89
      %s104 = sphi 0, %s90
      %s108 = sphi 0, %s108
      %s110 = sphi 0, %s108
      %s111 = sphi 0, %s110
      %s125 = sphi 0, %s111
      %s131 = sphi 0, %s133
      %s134 = sphi 0, %s131
      %s135 = sphi 0, %s134
      %s151 = sphi 0, %s135
    $region4: #{_lambda_.1} parent=1 // loop_header_branch
      %14 = sbr.rel (%p12) target = $region8
    $region5: #{_lambda_.1} parent=1 // loop_body
      %s16 = ssub.s32 %s11, 1
      %s17 = ssub.s32 %s11, 2
      %s18 = sadd.s32 %s11, 1
      %s19 = ssub.s32 %s11, %s18
      %p20 = scmp.eq.s32.totalorder %s19, 0
      %s22 = sadd.s32 %s21, 1
      %s23 = scalar_select %p20, %s21, %s22
      %p26 = pneg %p20
      %p27 = scmp.eq.s32.totalorder %s11, 1
      %p28 = por %p26, %p27
      %p29 = scmp.ne.s32.totalorder %s21, %s24
      %p30 = scmp.eq.s32.totalorder %s11, 0
      %p31 = por %p29, %p30
      %p32 = scmp.ne.s32.totalorder %s21, %s24
      %p33 = scmp.eq.s32.totalorder %s16, 1
      %p34 = por %p32, %p33
      %p35 = scmp.ne.s32.totalorder %s24, %s25
      %p36 = scmp.eq.s32.totalorder %s16, 0
      %p37 = por %p35, %p36
      %p38 = scmp.ne.s32.totalorder %s24, %s25
      %p39 = scmp.eq.s32.totalorder %s17, 1
      %p40 = por %p38, %p39
      %p42 = scmp.ne.s32.totalorder %s25, %s41
      %p43 = scmp.eq.s32.totalorder %s17, 0
      %p44 = por %p42, %p43
      %s46 = sadd.s32 %s45, 1
      %p49 = scmp.eq.s32.totalorder %s11, 1
      %p50 = scmp.ne.s32.totalorder %s45, %s47
      %p51 = scmp.eq.s32.totalorder %s11, 0
      %p52 = por %p50, %p51
      %p53 = scmp.ne.s32.totalorder %s45, %s47
      %p54 = scmp.eq.s32.totalorder %s16, 1
      %p55 = por %p53, %p54
      %p56 = scmp.ne.s32.totalorder %s47, %s48
      %p57 = scmp.eq.s32.totalorder %s16, 0
      %p58 = por %p56, %p57
      %p59 = scmp.ne.s32.totalorder %s47, %s48
      %p60 = scmp.eq.s32.totalorder %s17, 1
      %p61 = por %p59, %p60
      %p63 = scmp.ne.s32.totalorder %s48, %s62
      %p64 = scmp.eq.s32.totalorder %s17, 0
      %p65 = por %p63, %p64
      %s67 = sadd.s32 %s66, 1
      %p70 = scmp.eq.s32.totalorder %s11, 1
      %p71 = scmp.ne.s32.totalorder %s66, %s68
      %p72 = scmp.eq.s32.totalorder %s11, 0
      %p73 = por %p71, %p72
      %p74 = scmp.ne.s32.totalorder %s66, %s68
      %p75 = scmp.eq.s32.totalorder %s16, 1
      %p76 = por %p74, %p75
      %p77 = scmp.ne.s32.totalorder %s68, %s69
      %p78 = scmp.eq.s32.totalorder %s16, 0
      %p79 = por %p77, %p78
      %p80 = scmp.ne.s32.totalorder %s68, %s69
      %p81 = scmp.eq.s32.totalorder %s17, 1
      %p82 = por %p80, %p81
      %p84 = scmp.ne.s32.totalorder %s69, %s83
      %p85 = scmp.eq.s32.totalorder %s17, 0
      %p86 = por %p84, %p85
      %s88 = sadd.s32 %s87, 1
      %p91 = scmp.eq.s32.totalorder %s11, 1
      %p92 = scmp.ne.s32.totalorder %s87, %s89
      %p93 = scmp.eq.s32.totalorder %s11, 0
      %p94 = por %p92, %p93
      %p95 = scmp.ne.s32.totalorder %s87, %s89
      %p96 = scmp.eq.s32.totalorder %s16, 1
      %p97 = por %p95, %p96
      %p98 = scmp.ne.s32.totalorder %s89, %s90
      %p99 = scmp.eq.s32.totalorder %s16, 0
      %p100 = por %p98, %p99
      %p101 = scmp.ne.s32.totalorder %s89, %s90
      %p102 = scmp.eq.s32.totalorder %s17, 1
      %p103 = por %p101, %p102
      %p105 = scmp.ne.s32.totalorder %s90, %s104
      %p106 = scmp.eq.s32.totalorder %s17, 0
      %p107 = por %p105, %p106
      %s109 = sadd.s32 %s108, 1
      %p112 = scmp.eq.s32.totalorder %s11, 1
      %p113 = scmp.ne.s32.totalorder %s108, %s110
      %p114 = scmp.eq.s32.totalorder %s11, 0
      %p115 = por %p113, %p114
      %p116 = scmp.ne.s32.totalorder %s108, %s110
      %p117 = scmp.eq.s32.totalorder %s16, 1
      %p118 = por %p116, %p117
      %p119 = scmp.ne.s32.totalorder %s110, %s111
      %p120 = scmp.eq.s32.totalorder %s16, 0
      %p121 = por %p119, %p120
      %p122 = scmp.ne.s32.totalorder %s110, %s111
      %p123 = scmp.eq.s32.totalorder %s17, 1
      %p124 = por %p122, %p123
      %p126 = scmp.ne.s32.totalorder %s111, %s125
      %p127 = scmp.eq.s32.totalorder %s17, 0
      %p128 = por %p126, %p127
      %s129 = ssub.s32 %s11, %s18
      %p130 = scmp.eq.s32.totalorder %s129, 0
      %s132 = sadd.s32 %s131, 1
      %s133 = scalar_select %p130, %s131, %s132
      %p136 = pneg %p130
      %p137 = scmp.eq.s32.totalorder %s11, 1
      %p138 = por %p136, %p137
      %p139 = scmp.ne.s32.totalorder %s131, %s134
      %p140 = scmp.eq.s32.totalorder %s11, 0
      %p141 = por %p139, %p140
      %p142 = scmp.ne.s32.totalorder %s131, %s134
      %p143 = scmp.eq.s32.totalorder %s16, 1
      %p144 = por %p142, %p143
      %p145 = scmp.ne.s32.totalorder %s134, %s135
      %p146 = scmp.eq.s32.totalorder %s16, 0
      %p147 = por %p145, %p146
      %p148 = scmp.ne.s32.totalorder %s134, %s135
      %p149 = scmp.eq.s32.totalorder %s17, 1
      %p150 = por %p148, %p149
      %p152 = scmp.ne.s32.totalorder %s135, %s151
      %p153 = scmp.eq.s32.totalorder %s17, 0
      %p154 = por %p152, %p153
      %p155 = scmp.le.s32.totalorder 1, %s11
      %p156 = scmp.lt.s32.totalorder %s11, 3
      %p157 = pnand %p155, %p156
      %p158 = pneg %p157
      // Predicated region
      $region9: #{_lambda_.1} parent=5 // pred_check
        _
      $region10: #{_lambda_.1} parent=5 // pred_check_branch
        %160 = sbr.rel (%p157) target = $region12
      $region11: #{_lambda_.1} parent=5 // pred_region
        %s161 = ssub.s32 %s11, 1
        // Predicated region
        $region13: #{_lambda_.1} parent=11 // pred_check
          %p162 = pneg %p58
        $region14: #{_lambda_.1} parent=11 // pred_check_branch
          %164 = sbr.rel (%p162) target = $region16
        $region15: #{_lambda_.1} parent=11 // pred_region
          _
        $region16: #{_lambda_.1} parent=11 // pred_fallthru
          _
        // Predicated region
        $region17: #{_lambda_.1} parent=11 // pred_check
          %p165 = pneg %p79
        $region18: #{_lambda_.1} parent=11 // pred_check_branch
          %167 = sbr.rel (%p165) target = $region20
        $region19: #{_lambda_.1} parent=11 // pred_region
          _
        $region20: #{_lambda_.1} parent=11 // pred_fallthru
          _
        // Predicated region
        $region21: #{_lambda_.1} parent=11 // pred_check
          %p168 = pneg %p100
        $region22: #{_lambda_.1} parent=11 // pred_check_branch
          %170 = sbr.rel (%p168) target = $region24
        $region23: #{_lambda_.1} parent=11 // pred_region
          _
        $region24: #{_lambda_.1} parent=11 // pred_fallthru
          _
        // Predicated region
        $region25: #{_lambda_.1} parent=11 // pred_check
          %p171 = pneg %p121
        $region26: #{_lambda_.1} parent=11 // pred_check_branch
          %173 = sbr.rel (%p171) target = $region28
        $region27: #{_lambda_.1} parent=11 // pred_region
          _
        $region28: #{_lambda_.1} parent=11 // pred_fallthru
          _
      $region12: #{_lambda_.1} parent=5 // pred_fallthru
        _
      %p174 = scmp.lt.s32.totalorder %s11, 2
      // Predicated region
      $region29: #{_lambda_.1} parent=5 // pred_check
        %p175 = pneg %p174
      $region30: #{_lambda_.1} parent=5 // pred_check_branch
        %177 = sbr.rel (%p175) target = $region32
      $region31: #{_lambda_.1} parent=5 // pred_region
        // Predicated region
        $region33: #{_lambda_.1} parent=31 // pred_check
          %p178 = pneg %p31
        $region34: #{_lambda_.1} parent=31 // pred_check_branch
          %180 = sbr.rel (%p178) target = $region36
        $region35: #{_lambda_.1} parent=31 // pred_region
          %s181 = smul.u32 2, %s11
          %s182 = ssub.s32 3, %s181
          %p183 = scmp.lt.s32.totalorder %s182, 2
          %s184 = scalar_select %p183, %s182, 2
          %s185 = smul.u32 8, %s184
          %p186 = scmp.lt.s32.totalorder %s181, 2
          %s187 = scalar_select %p186, %s181, 2
          %s188 = smul.addr %s187, 8
          %s189 = scalar_lea.vmem %s0, %s188
          %s190 = smul.u32 2, %s11
          %s191 = ssub.s32 3, %s190
          %p192 = scmp.lt.s32.totalorder %s191, 2
          %s193 = scalar_select %p192, %s191, 2
          %s194 = smul.u32 8, %s193
        $region36: #{_lambda_.1} parent=31 // pred_fallthru
          _
      $region32: #{_lambda_.1} parent=5 // pred_fallthru
        _
      %p195 = scmp.le.s32.totalorder 1, %s11
      %p196 = scmp.lt.s32.totalorder %s11, 3
      %p197 = pnand %p195, %p196
      %p198 = pneg %p197
      // Predicated region
      $region37: #{_lambda_.1} parent=5 // pred_check
        _
      $region38: #{_lambda_.1} parent=5 // pred_check_branch
        %200 = sbr.rel (%p197) target = $region40
      $region39: #{_lambda_.1} parent=5 // pred_region
        %s201 = ssub.s32 %s11, 1
        %s202 = smul.u32 2, %s16
        %s203 = ssub.s32 3, %s202
        %p204 = scmp.lt.s32.totalorder %s203, 2
        %s205 = scalar_select %p204, %s203, 2
        %s206 = smul.u32 8, %s205
        %p207 = scmp.lt.s32.totalorder %s202, 2
        %s208 = scalar_select %p207, %s202, 2
        %s209 = smul.addr %s208, 8
        %s210 = scalar_lea.vmem %s0, %s209
        %p211 = pneg %p37
        %p212 = pneg %p34
        %p213 = pneg %p58
        %p214 = pneg %p55
        %p215 = pneg %p79
        %p216 = pneg %p76
        %p217 = pneg %p100
        %p218 = pneg %p97
        %p219 = pneg %p121
        %p220 = pneg %p118
        %p221 = pneg %p147
        %p222 = pneg %p144
        %s223 = sand.u32 %s134, 1
        %s224 = sand.u32 %s134, 1
        %s225 = smul.addr %s224, 16
        %s226 = scalar_lea.vmem [#allocation2], %s225
        %s227 = smul.u32 2, %s16
        %s228 = ssub.s32 3, %s227
        %p229 = scmp.lt.s32.totalorder %s228, 2
        %s230 = scalar_select %p229, %s228, 2
        %s231 = smul.u32 8, %s230
        %p232 = scmp.lt.s32.totalorder %s227, 2
        %s233 = scalar_select %p232, %s227, 2
        %s234 = smul.addr %s233, 8
        %s235 = scalar_lea.vmem %s0, %s234
        %s236 = smul.u32 2, %s16
        %s237 = ssub.s32 3, %s236
        %p238 = scmp.lt.s32.totalorder %s237, 2
        %s239 = scalar_select %p238, %s237, 2
        %s240 = smul.u32 8, %s239
        %s241 = smul.u32 2, %s16
        %s242 = ssub.s32 3, %s241
        %p243 = scmp.lt.s32.totalorder %s242, 2
        %s244 = scalar_select %p243, %s242, 2
        %s245 = smul.u32 8, %s244
        %v246 = vld [vmem:[%s235] sm:$0xff]
        %v247 = vld [vmem:[%s235 + $0x8] sm:$0xff]
        %v248 = vld [vmem:[%s1] sm:$0xff]
        %v249 = vld [vmem:[%s1 + $0x8] sm:$0xff]
        %v250 = vld [vmem:[%s1 + $0x10] sm:$0xff]
        %v251 = vld [vmem:[%s1 + $0x18] sm:$0xff]
        %v252 = vld [vmem:[%s2] sm:$0x1]
        %v254 = vperm.slane %v252, 0
        %vm256 = vcmask 261120
        %v258 = vsel %vm256, %v246, 0
        %v261 = vsel %vm256, %v247, 0
        %263 = vmatpush.msra.mxu0 0.0
        %264 = vmatpush.msra.mxu0 0.0
        %265 = vmatpush.msra.mxu0 0.0
        %266 = vmatpush.msra.mxu0 0.0
        %267 = vmatpush.msra.mxu0 0.0
        %268 = vmatpush.msra.mxu0 0.0
        %269 = vmatpush.msra.mxu0 0.0
        %270 = vmatpush.msra.mxu0 0.0
        %271 = vmatpush.msra.mxu0 0.0
        %272 = vmatpush.msra.mxu0 0.0
        %273 = vmatpush.msra.mxu0 0.0
        %274 = vmatpush.msra.mxu0 0.0
        %275 = vmatpush.msra.mxu0 %v251
        %276 = vmatpush.msra.mxu0 %v250
        %277 = vmatpush.msra.mxu0 %v249
        %278 = vmatpush.msra.mxu0 %v248
        %279 = vmatmul.f32.gmra.mxu0 %v258
        %v280 = vpop.f32.mrf.mxu0
        %v281 = vadd.f32 %v254, %v280
        %282 = vmatmul.f32.gmra.mxu0 %v261
        %v283 = vpop.f32.mrf.mxu0
        %v284 = vadd.f32 %v254, %v283
        %285 = vdwg.mxu0
        %v286 = vmul.f32 %v281, 0.5
        %v287 = vmul.f32 %v284, 0.5
        %v288 = vmul.f32 %v281, 0.70710677
        %v289 = vmul.f32 %v284, 0.70710677
        %v290 = vmul.f32 %v288, %v288
        %v291 = vmin.f32 16.0, %v290
        %v292 = vmul.f32 %v291, 2.1237322e-06
        %v293 = vadd.f32 %v292, 0.00028619796
        %v294 = vmul.f32 %v291, %v293
        %v295 = vadd.f32 %v294, 0.0036580483
        %v296 = vmul.f32 %v291, %v295
        %v297 = vadd.f32 %v296, 0.05243302
        %v298 = vmul.f32 %v291, %v297
        %v299 = vadd.f32 %v298, 0.18741608
        %v300 = vmul.f32 %v291, %v299
        %v301 = vadd.f32 %v300, 1.1283791
        %v302 = vmul.f32 %v288, %v301
        %v303 = vmul.f32 %v291, 3.8918573e-05
        %v304 = vadd.f32 %v303, 0.001143296
        %v305 = vmul.f32 %v291, %v304
        %v306 = vadd.f32 %v305, 0.014752088
        %v307 = vmul.f32 %v291, %v306
        %v308 = vadd.f32 %v307, 0.112945676
        %v309 = vmul.f32 %v291, %v308
        %v310 = vadd.f32 %v309, 0.4994258
        %v311 = vmul.f32 %v291, %v310
        %v312 = vadd.f32 %v311, 1.0
        %v313 = vrcp.pop %v312
        %v314 = vmul.f32 %v312, %v313
        %v315 = vsub.f32 1.0, %v314
        %v316 = vmul.f32 %v313, %v315
        %v317 = vadd.f32 %v313, %v316
        %vm318 = vweird.f32 %v312
        %vm319 = vweird.f32 %v313
        %vm320 = vmor %vm318, %vm319
        %v321 = vsel %vm320, %v313, %v317
        %v322 = vand.u32 2147483647, %v312
        %vm323 = vcmp.eq.f32.partialorder %v322, 8.507059e+37
        %v324 = vand.u32 %v312, 2147483648
        %v325 = vor.u32 1.1754944e-38, %v324
        %v326 = vsel %vm323, %v325, %v321
        %v327 = vmul.f32 %v302, %v326
        %v328 = vmin.f32 %v327, 1.0
        %v329 = vmax.f32 %v328, -1.0
        %v330 = vmul.f32 %v289, %v289
        %v331 = vmin.f32 16.0, %v330
        %v332 = vmul.f32 %v331, 2.1237322e-06
        %v333 = vadd.f32 %v332, 0.00028619796
        %v334 = vmul.f32 %v331, %v333
        %v335 = vadd.f32 %v334, 0.0036580483
        %v336 = vmul.f32 %v331, %v335
        %v337 = vadd.f32 %v336, 0.05243302
        %v338 = vmul.f32 %v331, %v337
        %v339 = vadd.f32 %v338, 0.18741608
        %v340 = vmul.f32 %v331, %v339
        %v341 = vadd.f32 %v340, 1.1283791
        %v342 = vmul.f32 %v289, %v341
        %v343 = vmul.f32 %v331, 3.8918573e-05
        %v344 = vadd.f32 %v343, 0.001143296
        %v345 = vmul.f32 %v331, %v344
        %v346 = vadd.f32 %v345, 0.014752088
        %v347 = vmul.f32 %v331, %v346
        %v348 = vadd.f32 %v347, 0.112945676
        %v349 = vmul.f32 %v331, %v348
        %v350 = vadd.f32 %v349, 0.4994258
        %v351 = vmul.f32 %v331, %v350
        %v352 = vadd.f32 %v351, 1.0
        %v353 = vrcp.pop %v352
        %v354 = vmul.f32 %v352, %v353
        %v355 = vsub.f32 1.0, %v354
        %v356 = vmul.f32 %v353, %v355
        %v357 = vadd.f32 %v353, %v356
        %vm358 = vweird.f32 %v352
        %vm359 = vweird.f32 %v353
        %vm360 = vmor %vm358, %vm359
        %v361 = vsel %vm360, %v353, %v357
        %v362 = vand.u32 2147483647, %v352
        %vm363 = vcmp.eq.f32.partialorder %v362, 8.507059e+37
        %v364 = vand.u32 %v352, 2147483648
        %v365 = vor.u32 1.1754944e-38, %v364
        %v366 = vsel %vm363, %v365, %v361
        %v367 = vmul.f32 %v342, %v366
        %v368 = vmin.f32 %v367, 1.0
        %v369 = vmax.f32 %v368, -1.0
        %v370 = vadd.f32 %v329, 1.0
        %v371 = vadd.f32 %v369, 1.0
        %v372 = vmul.f32 %v286, %v370
        %v373 = vmul.f32 %v287, %v371
        %v374 = vld [vmem:[%s3] sm:$0xff]
        %v375 = vld [vmem:[%s3 + $0x8] sm:$0xff]
        %v376 = vld [vmem:[%s3 + $0x10] sm:$0xff]
        %v377 = vld [vmem:[%s3 + $0x18] sm:$0xff]
        %v378 = vld [vmem:[%s3 + $0x20] sm:$0xff]
        %v379 = vld [vmem:[%s3 + $0x28] sm:$0xff]
        %v380 = vld [vmem:[%s3 + $0x30] sm:$0xff]
        %v381 = vld [vmem:[%s3 + $0x38] sm:$0xff]
        %v382 = vld [vmem:[%s3 + $0x40] sm:$0xff]
        %v383 = vld [vmem:[%s3 + $0x48] sm:$0xff]
        %v384 = vld [vmem:[%s3 + $0x50] sm:$0xff]
        %v385 = vld [vmem:[%s3 + $0x58] sm:$0xff]
        %v386 = vld [vmem:[%s3 + $0x60] sm:$0xff]
        %v387 = vld [vmem:[%s3 + $0x68] sm:$0xff]
        %v388 = vld [vmem:[%s3 + $0x70] sm:$0xff]
        %v389 = vld [vmem:[%s3 + $0x78] sm:$0xff]
        %v390 = vld [vmem:[%s4] sm:$0x1]
        %v392 = vperm.slane %v390, 0
        %394 = vmatpush.msra.mxu0 %v389
        %395 = vmatpush.msra.mxu0 %v388
        %396 = vmatpush.msra.mxu0 %v387
        %397 = vmatpush.msra.mxu0 %v386
        %398 = vmatpush.msra.mxu0 %v385
        %399 = vmatpush.msra.mxu0 %v384
        %400 = vmatpush.msra.mxu0 %v383
        %401 = vmatpush.msra.mxu0 %v382
        %402 = vmatpush.msra.mxu0 %v381
        %403 = vmatpush.msra.mxu0 %v380
        %404 = vmatpush.msra.mxu0 %v379
        %405 = vmatpush.msra.mxu0 %v378
        %406 = vmatpush.msra.mxu0 %v377
        %407 = vmatpush.msra.mxu0 %v376
        %408 = vmatpush.msra.mxu0 %v375
        %409 = vmatpush.msra.mxu0 %v374
        %410 = vmatmul.f32.gmra.mxu0 %v372
        %v411 = vpop.f32.mrf.mxu0
        %v412 = vadd.f32 %v392, %v411
        %413 = vmatmul.f32.gmra.mxu0 %v373
        %v414 = vpop.f32.mrf.mxu0
        %v415 = vadd.f32 %v392, %v414
        %416 = vdwg.mxu0
        %vm417 = vcmask 130048
        %418 = vst.msk [vmem:[%s226] sm:$0xff] %vm417, %v412
        %419 = vst.msk [vmem:[%s226 + $0x8] sm:$0xff] %vm417, %v415
        %s420 = sand.u32 %s134, 1
        %s421 = sand.u32 %s134, 1
        %s422 = smul.addr %s421, 16
        %s423 = scalar_lea.vmem [#allocation2], %s422
        // Predicated region
        $region41: #{_lambda_.1} parent=39 // pred_check
          %p424 = pneg %p144
        $region42: #{_lambda_.1} parent=39 // pred_check_branch
          %426 = sbr.rel (%p424) target = $region44
        $region43: #{_lambda_.1} parent=39 // pred_region
          %s427 = smul.u32 2, %s16
          %s428 = ssub.s32 3, %s427
          %p429 = scmp.lt.s32.totalorder %s428, 2
          %s430 = scalar_select %p429, %s428, 2
          %s431 = smul.u32 8, %s430
          %p432 = scmp.ne.s32.totalorder 0, %s431
          %s433 = smul.addr %s427, 8
          %s434 = scalar_lea.vmem %s5, %s433
          // Predicated region
          $region45: #{_lambda_.1} parent=43 // pred_check
            %p435 = pneg %p432
          $region46: #{_lambda_.1} parent=43 // pred_check_branch
            %437 = sbr.rel (%p435) target = $region48
          $region47: #{_lambda_.1} parent=43 // pred_region
            // Predicated region
            $region49: #{_lambda_.1} parent=47 // pred_check
              _
            $region50: #{_lambda_.1} parent=47 // pred_check_branch
              %439 = sbr.rel (0) target = $region52
            $region51: #{_lambda_.1} parent=47 // pred_region
              // Predicated region
              $region71: #{_lambda_.1} parent=51 // pred_check
                _
              $region72: #{_lambda_.1} parent=51 // pred_check_branch
                %491 = sbr.rel (0) target = $region74
              $region73: #{_lambda_.1} parent=51 // pred_region
                %s492 = sshrl.u32 %s430, 1
                // While loop
                $region75: #{_lambda_.1} parent=73 // loop_pre_header
                  _
                $region76: #{_lambda_.1} parent=73 // loop_header
                  %s494 = sphi 0, %s496
                  %p495 = scmp.ge.s32.totalorder %s494, %s492
                  %s499 = sphi 0, %s508
                  %s500 = sphi %s423, %s511
                  %s501 = sphi %s434, %s512
                $region77: #{_lambda_.1} parent=73 // loop_header_branch
                  %498 = sbr.rel (%p495) target = $region81
                $region78: #{_lambda_.1} parent=73 // loop_body
                  %v502 = vld [vmem:[%s500] sm:$0xff]
                  %503 = vst [vmem:[%s501] sm:$0xff] %v502
                  %v504 = vld [vmem:[%s500 + $0x8] sm:$0xff]
                  %505 = vst [vmem:[%s501 + $0x8] sm:$0xff] %v504
                  %s506 = sadd.s32 1, %s499
                  %p507 = scmp.ge.s32.totalorder %s506, %s492
                  %s508 = scalar_select %p507, 0, %s506
                  %s509 = smul.u32 %s508, 16
                  %s510 = smul.u32 %s508, 16
                  %s511 = scalar_lea.vmem %s423, %s509 [#allocation2]
                  %s512 = scalar_lea.vmem %s434, %s510
                $region79: #{_lambda_.1} parent=73 // loop_footer
                  %s496 = sadd.s32 %s494, 1
                $region80: #{_lambda_.1} parent=73 // loop_footer_branch
                  %493 = sbr.rel target = $region76
                $region81: #{_lambda_.1} parent=73 // loop_exit
                  _
                %s513 = sshrl.u32 %s430, 1
                %s514 = sand.u32 %s430, 1
                %s515 = smul.u32 %s513, 2
                %s516 = smul.u32 8, %s515
                %s517 = scalar_lea.vmem %s423, %s516 [#allocation2]
                %s518 = smul.u32 8, %s515
                %s519 = scalar_lea.vmem %s434, %s518
                // While loop
                $region82: #{_lambda_.1} parent=73 // loop_pre_header
                  _
                $region83: #{_lambda_.1} parent=73 // loop_header
                  %s521 = sphi 0, %s523
                  %p522 = scmp.ge.s32.totalorder %s521, %s514
                  %s526 = sphi 0, %s533
                  %s527 = sphi %s517, %s536
                  %s528 = sphi %s519, %s537
                $region84: #{_lambda_.1} parent=73 // loop_header_branch
                  %525 = sbr.rel (%p522) target = $region88
                $region85: #{_lambda_.1} parent=73 // loop_body
                  %v529 = vld [vmem:[%s527] sm:$0xff]
                  %530 = vst [vmem:[%s528] sm:$0xff] %v529
                  %s531 = sadd.s32 1, %s526
                  %p532 = scmp.ge.s32.totalorder %s531, %s514
                  %s533 = scalar_select %p532, 0, %s531
                  %s534 = smul.u32 %s533, 8
                  %s535 = smul.u32 %s533, 8
                  %s536 = scalar_lea.vmem %s517, %s534 [#allocation2]
                  %s537 = scalar_lea.vmem %s519, %s535
                $region86: #{_lambda_.1} parent=73 // loop_footer
                  %s523 = sadd.s32 %s521, 1
                $region87: #{_lambda_.1} parent=73 // loop_footer_branch
                  %520 = sbr.rel target = $region83
                $region88: #{_lambda_.1} parent=73 // loop_exit
                  _
              $region74: #{_lambda_.1} parent=51 // pred_fallthru
                _
              // Predicated region
              $region89: #{_lambda_.1} parent=51 // pred_check
                _
              $region90: #{_lambda_.1} parent=51 // pred_check_branch
                %539 = sbr.rel target = $region92
              $region91: #{_lambda_.1} parent=51 // pred_region
                _
              $region92: #{_lambda_.1} parent=51 // pred_fallthru
                _
            $region52: #{_lambda_.1} parent=47 // pred_fallthru
              _
            // Predicated region
            $region53: #{_lambda_.1} parent=47 // pred_check
              _
            $region54: #{_lambda_.1} parent=47 // pred_check_branch
              %441 = sbr.rel target = $region56
            $region55: #{_lambda_.1} parent=47 // pred_region
              %s443 = ssub.s32 256, 1
              %s444 = sshrl.u32 %s430, 1
              // While loop
              $region57: #{_lambda_.1} parent=55 // loop_pre_header
                _
              $region58: #{_lambda_.1} parent=55 // loop_header
                %s446 = sphi 0, %s448
                %p447 = scmp.ge.s32.totalorder %s446, %s444
                %s451 = sphi 0, %s460
                %s452 = sphi %s423, %s463
                %s453 = sphi %s434, %s464
              $region59: #{_lambda_.1} parent=55 // loop_header_branch
                %450 = sbr.rel (%p447) target = $region63
              $region60: #{_lambda_.1} parent=55 // loop_body
                %v454 = vld [vmem:[%s452] sm:%s443]
                %455 = vst [vmem:[%s453] sm:%s443] %v454
                %v456 = vld [vmem:[%s452 + $0x8] sm:%s443]
                %457 = vst [vmem:[%s453 + $0x8] sm:%s443] %v456
                %s458 = sadd.s32 1, %s451
                %p459 = scmp.ge.s32.totalorder %s458, %s444
                %s460 = scalar_select %p459, 0, %s458
                %s461 = smul.u32 %s460, 16
                %s462 = smul.u32 %s460, 16
                %s463 = scalar_lea.vmem %s423, %s461 [#allocation2]
                %s464 = scalar_lea.vmem %s434, %s462
              $region61: #{_lambda_.1} parent=55 // loop_footer
                %s448 = sadd.s32 %s446, 1
              $region62: #{_lambda_.1} parent=55 // loop_footer_branch
                %445 = sbr.rel target = $region58
              $region63: #{_lambda_.1} parent=55 // loop_exit
                _
              %s465 = sshrl.u32 %s430, 1
              %s466 = sand.u32 %s430, 1
              %s467 = smul.u32 %s465, 2
              %s468 = smul.u32 8, %s467
              %s469 = scalar_lea.vmem %s423, %s468 [#allocation2]
              %s470 = smul.u32 8, %s467
              %s471 = scalar_lea.vmem %s434, %s470
              // While loop
              $region64: #{_lambda_.1} parent=55 // loop_pre_header
                _
              $region65: #{_lambda_.1} parent=55 // loop_header
                %s473 = sphi 0, %s475
                %p474 = scmp.ge.s32.totalorder %s473, %s466
                %s478 = sphi 0, %s485
                %s479 = sphi %s469, %s488
                %s480 = sphi %s471, %s489
              $region66: #{_lambda_.1} parent=55 // loop_header_branch
                %477 = sbr.rel (%p474) target = $region70
              $region67: #{_lambda_.1} parent=55 // loop_body
                %v481 = vld [vmem:[%s479] sm:%s443]
                %482 = vst [vmem:[%s480] sm:%s443] %v481
                %s483 = sadd.s32 1, %s478
                %p484 = scmp.ge.s32.totalorder %s483, %s466
                %s485 = scalar_select %p484, 0, %s483
                %s486 = smul.u32 %s485, 8
                %s487 = smul.u32 %s485, 8
                %s488 = scalar_lea.vmem %s469, %s486 [#allocation2]
                %s489 = scalar_lea.vmem %s471, %s487
              $region68: #{_lambda_.1} parent=55 // loop_footer
                %s475 = sadd.s32 %s473, 1
              $region69: #{_lambda_.1} parent=55 // loop_footer_branch
                %472 = sbr.rel target = $region65
              $region70: #{_lambda_.1} parent=55 // loop_exit
                _
            $region56: #{_lambda_.1} parent=47 // pred_fallthru
              _
          $region48: #{_lambda_.1} parent=43 // pred_fallthru
            _
          %540 = vnop
        $region44: #{_lambda_.1} parent=39 // pred_fallthru
          _
      $region40: #{_lambda_.1} parent=5 // pred_fallthru
        _
      %p541 = scmp.le.s32.totalorder 2, %s11
      // Predicated region
      $region93: #{_lambda_.1} parent=5 // pred_check
        %p542 = pneg %p541
      $region94: #{_lambda_.1} parent=5 // pred_check_branch
        %544 = sbr.rel (%p542) target = $region96
      $region95: #{_lambda_.1} parent=5 // pred_region
        %s545 = ssub.s32 %s11, 2
        // Predicated region
        $region97: #{_lambda_.1} parent=95 // pred_check
          %p546 = pneg %p150
        $region98: #{_lambda_.1} parent=95 // pred_check_branch
          %548 = sbr.rel (%p546) target = $region100
        $region99: #{_lambda_.1} parent=95 // pred_region
          %s549 = sand.u32 %s135, 1
          %s550 = sand.u32 %s135, 1
          %s551 = smul.addr %s550, 16
          %s552 = scalar_lea.vmem [#allocation2], %s551
        $region100: #{_lambda_.1} parent=95 // pred_fallthru
          _
      $region96: #{_lambda_.1} parent=5 // pred_fallthru
        _
    $region6: #{_lambda_.1} parent=1 // loop_footer
      %s15 = sadd.s32 1, %s11
    $region7: #{_lambda_.1} parent=1 // loop_footer_branch
      %10 = sbr.rel target = $region3
    $region8: #{_lambda_.1} parent=1 // loop_exit
      _

</llo_original>
